<compile_context>
chip_gen: v7x
topology: tpu7x:2x2x1
jax: 0.10.0
libtpu: 0.0.40
codegen_flags: <defaults>
</compile_context>

<pallas_src>
import functools

import jax
import jax.numpy as jnp
from jax.experimental import pallas as pl
from jax.experimental.pallas import tpu as pltpu

LANES = 128


def _model_kernel(lam_ref,                       # (2,) f32 in SMEM: [lambda1, lambda3]
                  xh_ref, h_ref, xpad_ref,       # (N,P+H) bf16, (N,H) f32, (N,OP) f32
                  w1_ref, b1_ref, w2_ref, b2_ref,
                  w3_ref, b3_ref, w4_ref, b4_ref,
                  f_ref,                         # (N, OP) f32 (losses stashed in last row)
                  *, loss_lane):
    lambda1 = lam_ref[0]
    lambda3 = lam_ref[1]

    xh = xh_ref[...]                             # (N, P+H) bf16
    h = h_ref[...]                               # (N, H)   f32
    x_pad = xpad_ref[...]                        # (N, OP)  f32 (zero-padded lanes)
    N = h.shape[0]
    H = h.shape[1]

    # ---- MLP hot path: bf16 MXU operands, f32 accumulate / bias / ReLU.
    # Weight widths are padded to 256/128/128/OP -> lane-dense activations; padded
    # columns stay exactly zero through ReLU and contribute exactly zero downstream.
    a1 = jnp.maximum(
        jnp.dot(xh, w1_ref[...], preferred_element_type=jnp.float32) + b1_ref[...], 0.0)
    a2 = jnp.maximum(
        jnp.dot(a1.astype(jnp.bfloat16), w2_ref[...],
                preferred_element_type=jnp.float32) + b2_ref[...], 0.0)
    a3 = jnp.maximum(
        jnp.dot(a2.astype(jnp.bfloat16), w3_ref[...],
                preferred_element_type=jnp.float32) + b3_ref[...], 0.0)
    # w4/b4 zero-padded -> padded output lanes of f are exactly 0 (needed for part0).
    f = (jnp.dot(a3.astype(jnp.bfloat16), w4_ref[...],
                 preferred_element_type=jnp.float32) + b4_ref[...])

    # ---- part0 = ||f[:-1] - x[1:]||_F / (N - 1)
    # Sublane roll (XLU) + row mask instead of offset-by-1 sublane slices.
    x_next = pltpu.roll(x_pad, shift=N - 1, axis=0)          # row i -> x[i+1] (wraps)
    row_f = jax.lax.broadcasted_iota(jnp.int32, f.shape, 0)
    d0 = jnp.where(row_f < N - 1, f - x_next, 0.0)           # padded lanes: 0-0 = 0
    p0 = jnp.sqrt(jnp.sum(d0 * d0, keepdims=True)) * (1.0 / (N - 1))     # (1,1)

    # ---- part1 = lambda1 * ||mean(h, axis=0)||_1 / H
    mu = jnp.mean(h, axis=0, keepdims=True)                  # (1, H)
    p1 = (lambda1 / H) * jnp.sum(jnp.abs(mu), axis=1, keepdims=True)     # (1,1)

    # ---- part2 = lambda1 * | mean_i(h_i . h_i) / H - 1 |
    row_sq = jnp.sum(h * h, axis=1, keepdims=True)           # (N, 1)
    S = jnp.mean(row_sq, axis=0, keepdims=True)              # (1, 1)
    p2 = lambda1 * jnp.abs(S / H - 1.0)                      # (1,1)

    # ---- part3 = lambda3 * mean_i ||h[i+1] - h[i]||_1 / H
    h_next = pltpu.roll(h, shift=N - 1, axis=0)
    row_h = jax.lax.broadcasted_iota(jnp.int32, h.shape, 0)
    d3 = jnp.where(row_h < N - 1, h_next - h, 0.0)
    p3 = (lambda3 / (H * (N - 1))) * jnp.sum(jnp.abs(d3), keepdims=True)  # (1,1)

    # ---- Stash the 4 scalars into the guaranteed-zero padded lanes of the LAST row
    # of f (that row is not used by part0's mask).  Single unmasked lane-dense store,
    # single writeback DMA; the wrapper unpacks them.
    lane = jax.lax.broadcasted_iota(jnp.int32, f.shape, 1)
    stash = (jnp.where(lane == loss_lane, p0, 0.0)
             + jnp.where(lane == loss_lane + 1, p1, 0.0)
             + jnp.where(lane == loss_lane + 2, p2, 0.0)
             + jnp.where(lane == loss_lane + 3, p3, 0.0))
    f_ref[...] = f + jnp.where(row_f == N - 1, stash, 0.0)


def prep_params(params, input_shape, hidden_dim):
    """One-time param prep: zero-pad hidden widths (200->256, 100->128), pad the
    output width to a lane multiple, cast weights to bf16, reshape biases.
    All padded lanes / rows are exactly zero by construction (built from jnp.zeros
    BEFORE the bf16 cast), which part0's masking relies on."""
    w1, b1, w2, b2, w3, b3, w4, b4 = params
    P, H = input_shape, hidden_dim
    assert w1.shape == (P + H, 200) and w2.shape == (200, 100)
    assert w3.shape == (100, 100) and w4.shape == (100, P)

    H1, H2, H3 = 256, 128, 128
    out_pad = max(LANES, pl.cdiv(P, LANES) * LANES)
    assert P + 4 <= out_pad, "need 4 spare padded lanes to stash the scalar losses"
    # TODO(synk): if P is an exact multiple of 128, fall back to a separate loss output.

    f32, bf16 = jnp.float32, jnp.bfloat16
    w1p = jnp.zeros((P + H, H1), f32).at[:, :200].set(w1).astype(bf16)
    b1p = jnp.zeros((1, H1), f32).at[0, :200].set(b1)
    w2p = jnp.zeros((H1, H2), f32).at[:200, :100].set(w2).astype(bf16)
    b2p = jnp.zeros((1, H2), f32).at[0, :100].set(b2)
    w3p = jnp.zeros((H2, H3), f32).at[:100, :100].set(w3).astype(bf16)
    b3p = jnp.zeros((1, H3), f32).at[0, :100].set(b3)
    w4p = jnp.zeros((H3, out_pad), f32).at[:100, :P].set(w4).astype(bf16)
    b4p = jnp.zeros((1, out_pad), f32).at[0, :P].set(b4)
    return (w1p, b1p, w2p, b2p, w3p, b3p, w4p, b4p)


@jax.jit
def my_model_forward(x, h, prepped, lambda1=1.0, lambda3=1.0):
    """Jitted Pallas TPU forward of MyModel. Returns (f_x_h, part0, part1, part2, part3).
    `prepped` must come from prep_params (padded / bf16 weights)."""
    N, P = x.shape
    H = h.shape[1]
    assert N >= 2, "forward needs N >= 2 (uses f[:-1]-x[1:] and divides by N-1)"
    w1p, b1p, w2p, b2p, w3p, b3p, w4p, b4p = prepped
    out_pad = w4p.shape[1]

    # Per-call input prep (fused into this jit): concat for the single layer-1
    # matmul, lane-pad x for part0, pack the lambdas for SMEM.
    xh = jnp.concatenate([x, h], axis=1).astype(jnp.bfloat16)
    h32 = h.astype(jnp.float32)
    x_pad = jnp.zeros((N, out_pad), jnp.float32).at[:, :P].set(x)
    lam = jnp.stack([lambda1, lambda3]).astype(jnp.float32)

    # Advisory cost estimate so XLA schedules the surrounding fused ops sensibly.
    flops = 2 * N * (xh.shape[1] * w1p.shape[1] + w1p.shape[1] * w2p.shape[1]
                     + w2p.shape[1] * w3p.shape[1] + w3p.shape[1] * out_pad)
    operands = (xh, h32, x_pad, w1p, b1p, w2p, b2p, w3p, b3p, w4p, b4p)
    bytes_accessed = sum(int(a.size) * a.dtype.itemsize for a in operands) \
        + N * out_pad * 4 + 8

    vmem = pl.BlockSpec(memory_space=pltpu.MemorySpace.VMEM)
    smem = pl.BlockSpec(memory_space=pltpu.MemorySpace.SMEM)

    f_pad = pl.pallas_call(
        functools.partial(_model_kernel, loss_lane=P),
        out_shape=jax.ShapeDtypeStruct((N, out_pad), jnp.float32),
        in_specs=[smem] + [vmem] * 11,
        out_specs=vmem,
        cost_estimate=pl.CostEstimate(flops=flops, transcendentals=0,
                                      bytes_accessed=bytes_accessed),
    )(
        lam,
        xh, h32, x_pad,
        w1p, b1p, w2p, b2p, w3p, b3p, w4p, b4p,
    )

    # Unpack (fused inside this jit -- no extra dispatch).
    f = f_pad[:, :P]
    part0 = f_pad[N - 1, P]
    part1 = f_pad[N - 1, P + 1]
    part2 = f_pad[N - 1, P + 2]
    part3 = f_pad[N - 1, P + 3]
    return f, part0, part1, part2, part3


def init_params(key, input_shape, hidden_dim):
    """Deterministic synthetic init: weights stored as (in, out), biases as (out,)."""
    dims = [(input_shape + hidden_dim, 200), (200, 100), (100, 100), (100, input_shape)]
    params = []
    for i, (din, dout) in enumerate(dims):
        kw, kb = jax.random.split(jax.random.fold_in(key, i))
        params.append(jax.random.normal(kw, (din, dout), jnp.float32) * 0.1)
        params.append(jax.random.normal(kb, (dout,), jnp.float32) * 0.01)
    return tuple(params)


if __name__ == "__main__":
    # Small shapes consistent with the module: N=8 samples, input_shape=16, hidden_dim=32.
    N, P, H = 8, 16, 32

    key = jax.random.PRNGKey(0)
    kx, kh, kp = jax.random.split(key, 3)

    x = jax.random.normal(kx, (N, P), jnp.float32)
    h = jax.random.normal(kh, (N, H), jnp.float32)    # self.h[idx0:idx1]
    params = init_params(kp, P, H)
    prepped = prep_params(params, P, H)               # one-time weight prep

    f_x_h, part0, part1, part2, part3 = my_model_forward(
        x, h, prepped, lambda1=1.0, lambda3=1.0)
    jax.block_until_ready((f_x_h, part0, part1, part2, part3))

    # Pure-JAX reference (same bf16-operand / f32-accumulate matmul precision;
    # unpadded weights -- zero padding is exact so results must match).
    w1, b1, w2, b2, w3, b3, w4, b4 = params
    xh = jnp.concatenate([x, h], axis=1).astype(jnp.bfloat16)
    a = jnp.maximum(jnp.dot(xh, w1.astype(jnp.bfloat16),
                            preferred_element_type=jnp.float32) + b1, 0.0)
    a = jnp.maximum(jnp.dot(a.astype(jnp.bfloat16), w2.astype(jnp.bfloat16),
                            preferred_element_type=jnp.float32) + b2, 0.0)
    a = jnp.maximum(jnp.dot(a.astype(jnp.bfloat16), w3.astype(jnp.bfloat16),
                            preferred_element_type=jnp.float32) + b3, 0.0)
    f_ref = jnp.dot(a.astype(jnp.bfloat16), w4.astype(jnp.bfloat16),
                    preferred_element_type=jnp.float32) + b4
    r0 = jnp.linalg.norm(f_ref[:-1] - x[1:]) / (N - 1)
    r1 = jnp.sum(jnp.abs(jnp.mean(h, axis=0))) / H
    r2 = jnp.abs(jnp.mean(jnp.sum(h * h, axis=1)) / H - 1.0)
    r3 = jnp.mean(jnp.sum(jnp.abs(h[1:] - h[:-1]), axis=1)) / H

    assert jnp.allclose(f_x_h, f_ref, atol=5e-3, rtol=5e-3)
    assert jnp.allclose(part0, r0, atol=5e-3, rtol=5e-3)
    assert jnp.allclose(part1, r1, atol=5e-3, rtol=5e-3)
    assert jnp.allclose(part2, r2, atol=5e-3, rtol=5e-3)
    assert jnp.allclose(part3, r3, atol=5e-3, rtol=5e-3)

    print("KERNEL_OK")
</pallas_src>

<mosaic_0001>
module attributes {stable_mosaic.version = 11 : i64} {
  func.func @_model_kernel(%arg0: memref<2xf32, #tpu.memory_space<smem>>, %arg1: memref<8x48xbf16, #tpu.memory_space<vmem>>, %arg2: memref<8x32xf32, #tpu.memory_space<vmem>>, %arg3: memref<8x128xf32, #tpu.memory_space<vmem>>, %arg4: memref<48x256xbf16, #tpu.memory_space<vmem>>, %arg5: memref<1x256xf32, #tpu.memory_space<vmem>>, %arg6: memref<256x128xbf16, #tpu.memory_space<vmem>>, %arg7: memref<1x128xf32, #tpu.memory_space<vmem>>, %arg8: memref<128x128xbf16, #tpu.memory_space<vmem>>, %arg9: memref<1x128xf32, #tpu.memory_space<vmem>>, %arg10: memref<128x128xbf16, #tpu.memory_space<vmem>>, %arg11: memref<1x128xf32, #tpu.memory_space<vmem>>, %arg12: memref<8x128xf32, #tpu.memory_space<vmem>>) attributes {dimension_semantics = [], scalar_prefetch = 0 : i64, scratch_operands = 0 : i64, tpu.core_type = #tpu.core_type<tc>} {
    %c0 = arith.constant 0 : index
    %0 = memref.load %arg0[%c0] : memref<2xf32, #tpu.memory_space<smem>>
    %c1 = arith.constant 1 : index
    %1 = memref.load %arg0[%c1] : memref<2xf32, #tpu.memory_space<smem>>
    %c0_0 = arith.constant 0 : index
    %c0_1 = arith.constant 0 : index
    %2 = vector.load %arg1[%c0_0, %c0_1] : memref<8x48xbf16, #tpu.memory_space<vmem>>, vector<8x48xbf16>
    %c0_2 = arith.constant 0 : index
    %c0_3 = arith.constant 0 : index
    %3 = vector.load %arg2[%c0_2, %c0_3] : memref<8x32xf32, #tpu.memory_space<vmem>>, vector<8x32xf32>
    %c0_4 = arith.constant 0 : index
    %c0_5 = arith.constant 0 : index
    %4 = vector.load %arg3[%c0_4, %c0_5] : memref<8x128xf32, #tpu.memory_space<vmem>>, vector<8x128xf32>
    %c0_6 = arith.constant 0 : index
    %c0_7 = arith.constant 0 : index
    %5 = vector.load %arg4[%c0_6, %c0_7] : memref<48x256xbf16, #tpu.memory_space<vmem>>, vector<48x256xbf16>
    %cst = arith.constant dense<0.000000e+00> : vector<8x256xf32>
    %6 = tpu.matmul %2, %5, %cst {dimension_numbers = #tpu.dot_dimension_numbers<[1], [0], [0], [1], [0, 0, 1, 1], [], []>} : vector<8x48xbf16>, vector<48x256xbf16>, vector<8x256xf32> -> vector<8x256xf32>
    %c0_8 = arith.constant 0 : index
    %c0_9 = arith.constant 0 : index
    %7 = vector.load %arg5[%c0_8, %c0_9] : memref<1x256xf32, #tpu.memory_space<vmem>>, vector<1x256xf32>
    %8 = vector.broadcast %7 : vector<1x256xf32> to vector<8x256xf32>
    %9 = arith.addf %6, %8 : vector<8x256xf32>
    %cst_10 = arith.constant 0.000000e+00 : f32
    %10 = vector.broadcast %cst_10 : f32 to vector<8x256xf32>
    %11 = arith.maximumf %9, %10 : vector<8x256xf32>
    %12 = arith.truncf %11 : vector<8x256xf32> to vector<8x256xbf16>
    %c0_11 = arith.constant 0 : index
    %c0_12 = arith.constant 0 : index
    %13 = vector.load %arg6[%c0_11, %c0_12] : memref<256x128xbf16, #tpu.memory_space<vmem>>, vector<256x128xbf16>
    %cst_13 = arith.constant dense<0.000000e+00> : vector<8x128xf32>
    %14 = tpu.matmul %12, %13, %cst_13 {dimension_numbers = #tpu.dot_dimension_numbers<[1], [0], [0], [1], [0, 0, 1, 1], [], []>} : vector<8x256xbf16>, vector<256x128xbf16>, vector<8x128xf32> -> vector<8x128xf32>
    %c0_14 = arith.constant 0 : index
    %c0_15 = arith.constant 0 : index
    %15 = vector.load %arg7[%c0_14, %c0_15] : memref<1x128xf32, #tpu.memory_space<vmem>>, vector<1x128xf32>
    %16 = vector.broadcast %15 : vector<1x128xf32> to vector<8x128xf32>
    %17 = arith.addf %14, %16 : vector<8x128xf32>
    %cst_16 = arith.constant 0.000000e+00 : f32
    %18 = vector.broadcast %cst_16 : f32 to vector<8x128xf32>
    %19 = arith.maximumf %17, %18 : vector<8x128xf32>
    %20 = arith.truncf %19 : vector<8x128xf32> to vector<8x128xbf16>
    %c0_17 = arith.constant 0 : index
    %c0_18 = arith.constant 0 : index
    %21 = vector.load %arg8[%c0_17, %c0_18] : memref<128x128xbf16, #tpu.memory_space<vmem>>, vector<128x128xbf16>
    %cst_19 = arith.constant dense<0.000000e+00> : vector<8x128xf32>
    %22 = tpu.matmul %20, %21, %cst_19 {dimension_numbers = #tpu.dot_dimension_numbers<[1], [0], [0], [1], [0, 0, 1, 1], [], []>} : vector<8x128xbf16>, vector<128x128xbf16>, vector<8x128xf32> -> vector<8x128xf32>
    %c0_20 = arith.constant 0 : index
    %c0_21 = arith.constant 0 : index
    %23 = vector.load %arg9[%c0_20, %c0_21] : memref<1x128xf32, #tpu.memory_space<vmem>>, vector<1x128xf32>
    %24 = vector.broadcast %23 : vector<1x128xf32> to vector<8x128xf32>
    %25 = arith.addf %22, %24 : vector<8x128xf32>
    %cst_22 = arith.constant 0.000000e+00 : f32
    %26 = vector.broadcast %cst_22 : f32 to vector<8x128xf32>
    %27 = arith.maximumf %25, %26 : vector<8x128xf32>
    %28 = arith.truncf %27 : vector<8x128xf32> to vector<8x128xbf16>
    %c0_23 = arith.constant 0 : index
    %c0_24 = arith.constant 0 : index
    %29 = vector.load %arg10[%c0_23, %c0_24] : memref<128x128xbf16, #tpu.memory_space<vmem>>, vector<128x128xbf16>
    %cst_25 = arith.constant dense<0.000000e+00> : vector<8x128xf32>
    %30 = tpu.matmul %28, %29, %cst_25 {dimension_numbers = #tpu.dot_dimension_numbers<[1], [0], [0], [1], [0, 0, 1, 1], [], []>} : vector<8x128xbf16>, vector<128x128xbf16>, vector<8x128xf32> -> vector<8x128xf32>
    %c0_26 = arith.constant 0 : index
    %c0_27 = arith.constant 0 : index
    %31 = vector.load %arg11[%c0_26, %c0_27] : memref<1x128xf32, #tpu.memory_space<vmem>>, vector<1x128xf32>
    %32 = vector.broadcast %31 : vector<1x128xf32> to vector<8x128xf32>
    %33 = arith.addf %30, %32 : vector<8x128xf32>
    %c7_i32 = arith.constant 7 : i32
    %34 = tpu.dynamic_rotate %4 by %c7_i32 dim 0 : vector<8x128xf32>, i32 -> vector<8x128xf32>
    %35 = tpu.iota {dimensions = array<i32: 0>} : vector<8x128xi32>
    %c7_i32_28 = arith.constant 7 : i32
    %36 = vector.broadcast %c7_i32_28 : i32 to vector<8x128xi32>
    %37 = arith.cmpi slt, %35, %36 : vector<8x128xi32>
    %38 = arith.subf %33, %34 : vector<8x128xf32>
    %cst_29 = arith.constant 0.000000e+00 : f32
    %39 = vector.broadcast %cst_29 : f32 to vector<8x128xf32>
    %40 = arith.select %37, %38, %39 : vector<8x128xi1>, vector<8x128xf32>
    %41 = arith.mulf %40, %40 : vector<8x128xf32>
    %42 = vector.shape_cast %41 : vector<8x128xf32> to vector<1x8x128xf32>
    %cst_30 = arith.constant dense<0.000000e+00> : vector<1xf32>
    %43 = vector.multi_reduction <add>, %42, %cst_30 [1, 2] : vector<1x8x128xf32> to vector<1xf32>
    %44 = vector.shape_cast %43 : vector<1xf32> to vector<1x1x1xf32>
    %45 = vector.extract %44[0, 0, 0] : f32 from vector<1x1x1xf32>
    %46 = vector.broadcast %45 : f32 to vector<1x1xf32>
    %47 = math.sqrt %46 : vector<1x1xf32>
    %cst_31 = arith.constant 0.142857149 : f32
    %48 = vector.broadcast %cst_31 : f32 to vector<1x1xf32>
    %49 = arith.mulf %47, %48 : vector<1x1xf32>
    %cst_32 = arith.constant dense<0.000000e+00> : vector<32xf32>
    %50 = vector.multi_reduction <add>, %3, %cst_32 [0] : vector<8x32xf32> to vector<32xf32>
    %51 = vector.shape_cast %50 : vector<32xf32> to vector<1x32xf32>
    %cst_33 = arith.constant 8.000000e+00 : f32
    %52 = vector.broadcast %cst_33 : f32 to vector<1x32xf32>
    %53 = arith.divf %51, %52 : vector<1x32xf32>
    %cst_34 = arith.constant 3.200000e+01 : f32
    %54 = arith.divf %0, %cst_34 : f32
    %55 = math.absf %53 : vector<1x32xf32>
    %cst_35 = arith.constant dense<0.000000e+00> : vector<1xf32>
    %56 = vector.multi_reduction <add>, %55, %cst_35 [1] : vector<1x32xf32> to vector<1xf32>
    %57 = vector.shape_cast %56 : vector<1xf32> to vector<1x1xf32>
    %58 = vector.broadcast %54 : f32 to vector<1x1xf32>
    %59 = arith.mulf %58, %57 : vector<1x1xf32>
    %60 = arith.mulf %3, %3 : vector<8x32xf32>
    %cst_36 = arith.constant dense<0.000000e+00> : vector<8xf32>
    %61 = vector.multi_reduction <add>, %60, %cst_36 [1] : vector<8x32xf32> to vector<8xf32>
    %62 = vector.shape_cast %61 : vector<8xf32> to vector<8x1xf32>
    %cst_37 = arith.constant dense<0.000000e+00> : vector<1xf32>
    %63 = vector.multi_reduction <add>, %62, %cst_37 [0] : vector<8x1xf32> to vector<1xf32>
    %64 = vector.shape_cast %63 : vector<1xf32> to vector<1x1xf32>
    %cst_38 = arith.constant 8.000000e+00 : f32
    %65 = vector.broadcast %cst_38 : f32 to vector<1x1xf32>
    %66 = arith.divf %64, %65 : vector<1x1xf32>
    %cst_39 = arith.constant 3.200000e+01 : f32
    %67 = vector.broadcast %cst_39 : f32 to vector<1x1xf32>
    %68 = arith.divf %66, %67 : vector<1x1xf32>
    %cst_40 = arith.constant 1.000000e+00 : f32
    %69 = vector.broadcast %cst_40 : f32 to vector<1x1xf32>
    %70 = arith.subf %68, %69 : vector<1x1xf32>
    %71 = math.absf %70 : vector<1x1xf32>
    %72 = vector.broadcast %0 : f32 to vector<1x1xf32>
    %73 = arith.mulf %72, %71 : vector<1x1xf32>
    %c7_i32_41 = arith.constant 7 : i32
    %74 = tpu.dynamic_rotate %3 by %c7_i32_41 dim 0 : vector<8x32xf32>, i32 -> vector<8x32xf32>
    %75 = tpu.iota {dimensions = array<i32: 0>} : vector<8x32xi32>
    %c7_i32_42 = arith.constant 7 : i32
    %76 = vector.broadcast %c7_i32_42 : i32 to vector<8x32xi32>
    %77 = arith.cmpi slt, %75, %76 : vector<8x32xi32>
    %78 = arith.subf %74, %3 : vector<8x32xf32>
    %cst_43 = arith.constant 0.000000e+00 : f32
    %79 = vector.broadcast %cst_43 : f32 to vector<8x32xf32>
    %80 = arith.select %77, %78, %79 : vector<8x32xi1>, vector<8x32xf32>
    %cst_44 = arith.constant 2.240000e+02 : f32
    %81 = arith.divf %1, %cst_44 : f32
    %82 = math.absf %80 : vector<8x32xf32>
    %83 = vector.shape_cast %82 : vector<8x32xf32> to vector<1x8x32xf32>
    %cst_45 = arith.constant dense<0.000000e+00> : vector<1xf32>
    %84 = vector.multi_reduction <add>, %83, %cst_45 [1, 2] : vector<1x8x32xf32> to vector<1xf32>
    %85 = vector.shape_cast %84 : vector<1xf32> to vector<1x1x1xf32>
    %86 = vector.extract %85[0, 0, 0] : f32 from vector<1x1x1xf32>
    %87 = vector.broadcast %86 : f32 to vector<1x1xf32>
    %88 = vector.broadcast %81 : f32 to vector<1x1xf32>
    %89 = arith.mulf %88, %87 : vector<1x1xf32>
    %90 = tpu.iota {dimensions = array<i32: 1>} : vector<8x128xi32>
    %c16_i32 = arith.constant 16 : i32
    %91 = vector.broadcast %c16_i32 : i32 to vector<8x128xi32>
    %92 = arith.cmpi eq, %90, %91 : vector<8x128xi32>
    %cst_46 = arith.constant 0.000000e+00 : f32
    %93 = vector.shape_cast %49 : vector<1x1xf32> to vector<1x1xf32>
    %94 = vector.broadcast %93 : vector<1x1xf32> to vector<8x128xf32>
    %95 = vector.broadcast %cst_46 : f32 to vector<8x128xf32>
    %96 = arith.select %92, %94, %95 : vector<8x128xi1>, vector<8x128xf32>
    %c17_i32 = arith.constant 17 : i32
    %97 = vector.broadcast %c17_i32 : i32 to vector<8x128xi32>
    %98 = arith.cmpi eq, %90, %97 : vector<8x128xi32>
    %cst_47 = arith.constant 0.000000e+00 : f32
    %99 = vector.shape_cast %59 : vector<1x1xf32> to vector<1x1xf32>
    %100 = vector.broadcast %99 : vector<1x1xf32> to vector<8x128xf32>
    %101 = vector.broadcast %cst_47 : f32 to vector<8x128xf32>
    %102 = arith.select %98, %100, %101 : vector<8x128xi1>, vector<8x128xf32>
    %103 = arith.addf %96, %102 : vector<8x128xf32>
    %c18_i32 = arith.constant 18 : i32
    %104 = vector.broadcast %c18_i32 : i32 to vector<8x128xi32>
    %105 = arith.cmpi eq, %90, %104 : vector<8x128xi32>
    %cst_48 = arith.constant 0.000000e+00 : f32
    %106 = vector.shape_cast %73 : vector<1x1xf32> to vector<1x1xf32>
    %107 = vector.broadcast %106 : vector<1x1xf32> to vector<8x128xf32>
    %108 = vector.broadcast %cst_48 : f32 to vector<8x128xf32>
    %109 = arith.select %105, %107, %108 : vector<8x128xi1>, vector<8x128xf32>
    %110 = arith.addf %103, %109 : vector<8x128xf32>
    %c19_i32 = arith.constant 19 : i32
    %111 = vector.broadcast %c19_i32 : i32 to vector<8x128xi32>
    %112 = arith.cmpi eq, %90, %111 : vector<8x128xi32>
    %cst_49 = arith.constant 0.000000e+00 : f32
    %113 = vector.shape_cast %89 : vector<1x1xf32> to vector<1x1xf32>
    %114 = vector.broadcast %113 : vector<1x1xf32> to vector<8x128xf32>
    %115 = vector.broadcast %cst_49 : f32 to vector<8x128xf32>
    %116 = arith.select %112, %114, %115 : vector<8x128xi1>, vector<8x128xf32>
    %117 = arith.addf %110, %116 : vector<8x128xf32>
    %c7_i32_50 = arith.constant 7 : i32
    %118 = vector.broadcast %c7_i32_50 : i32 to vector<8x128xi32>
    %119 = arith.cmpi eq, %35, %118 : vector<8x128xi32>
    %cst_51 = arith.constant 0.000000e+00 : f32
    %120 = vector.broadcast %cst_51 : f32 to vector<8x128xf32>
    %121 = arith.select %119, %117, %120 : vector<8x128xi1>, vector<8x128xf32>
    %122 = arith.addf %33, %121 : vector<8x128xf32>
    %c0_52 = arith.constant 0 : index
    %c0_53 = arith.constant 0 : index
    %123 = vector.load %arg12[%c0_52, %c0_53] : memref<8x128xf32, #tpu.memory_space<vmem>>, vector<8x128xf32>
    tpu.vector_store %arg12[%c0_52, %c0_53], %122 {strides = array<i32>} : memref<8x128xf32, #tpu.memory_space<vmem>>, vector<8x128xf32>,
    return
  }
}

</mosaic_0001>

<llo_original>
// kernel: my_model_forward.1
$region0: #{my_model_forward.1}
  #allocation0 [shape = 'u32[]', space=smem, size = 0x4, offset = 0x4, fixed_abs, tag = 'smem constant byte address 0x4 - core index']
  #allocation1 [shape = 'u32[144,128]{1,0:T(1,128)}', space=vmem, size = 0x12000, scoped, tag = 'internal scratch']
  %s0 = inlined_call_operand.vmem [shape: f32[2], index: 0, kind: input, shape index: {}]
  %s1 = inlined_call_operand.vmem [shape: bf16[8,48], index: 1, kind: input, shape index: {}]
  %s2 = inlined_call_operand.vmem [shape: f32[8,32], index: 2, kind: input, shape index: {}]
  %s3 = inlined_call_operand.vmem [shape: f32[8,128], index: 3, kind: input, shape index: {}]
  %s4 = inlined_call_operand.vmem [shape: bf16[48,256], index: 4, kind: input, shape index: {}]
  %s5 = inlined_call_operand.vmem [shape: f32[1,256], index: 5, kind: input, shape index: {}]
  %s6 = inlined_call_operand.hbm [shape: bf16[256,128], index: 6, kind: input, shape index: {}]
  %s7 = inlined_call_operand.hbm [shape: f32[1,128], index: 7, kind: input, shape index: {}]
  %s8 = inlined_call_operand.vmem [shape: bf16[128,128], index: 8, kind: input, shape index: {}]
  %s9 = inlined_call_operand.hbm [shape: f32[1,128], index: 9, kind: input, shape index: {}]
  %s10 = inlined_call_operand.hbm [shape: bf16[128,128], index: 10, kind: input, shape index: {}]
  %s11 = inlined_call_operand.hbm [shape: f32[1,128], index: 11, kind: input, shape index: {}]
  %s12 = inlined_call_operand.vmem [shape: f32[8,128], index: 12, kind: output, shape index: {}]
  %s13 = sld [smem:[#allocation0]]
  $region82: #{my_model_forward.1} parent=0
    _
  %s15 = ssub.s32 1, %s13
  %s16 = scalar_select 0, %s15, %s13
  $region1: #{my_model_forward.1} parent=0
    #allocation2 [shape = 'u8[512]{0}', space=smem, size = 0x200, scoped, tag = 'input window, operand 0, single buffered']
    #allocation3 [shape = 's32[1]{0}', space=sflag, size = 0x4, scoped, tag = 'scoped memory for my_model_forward.1']
    #allocation4 [shape = 's32[1]{0}', space=sflag, size = 0x4, scoped, tag = 'scoped memory for my_model_forward.1']
    #allocation5 [shape = 'u8[65536]{0}', space=vmem, size = 0x10000, scoped, tag = 'input window, operand 6, single buffered']
    #allocation6 [shape = 'u8[512]{0}', space=vmem, size = 0x400, scoped, tag = 'input window, operand 7, single buffered']
    #allocation7 [shape = 's32[1]{0}', space=sflag, size = 0x4, scoped, tag = 'scoped memory for my_model_forward.1']
    #allocation8 [shape = 'u8[512]{0}', space=vmem, size = 0x400, scoped, tag = 'input window, operand 9, single buffered']
    #allocation9 [shape = 'u8[32768]{0}', space=vmem, size = 0x8000, scoped, tag = 'input window, operand 10, single buffered']
    #allocation10 [shape = 's32[1]{0}', space=sflag, size = 0x4, scoped, tag = 'scoped memory for my_model_forward.1']
    #allocation11 [shape = 'u8[512]{0}', space=vmem, size = 0x400, scoped, tag = 'input window, operand 11, single buffered']
    %17 = vsyncpa [#allocation4], 0
    %18 = vsyncpa [#allocation3], 0
    %19 = vsyncpa [#allocation7], 0
    %20 = vsyncpa [#allocation10], 0
    // Predicated region
    $region2: #{my_model_forward.1} parent=1 // pred_check
      _
    $region3: #{my_model_forward.1} parent=1 // pred_check_branch
      %22 = sbr.rel (0) target = $region5
    $region4: #{my_model_forward.1} parent=1 // pred_region
      %s24 = ssub.s32 16, 16
      %25 = vsyncadd [#allocation4], %s24
      %s27 = sshll.u32 %s0, 4
      %s28 = int_to_ptr.vmem [resolvable:$true] %s27
      %30 = dma.vmem_to_smem %s28, 16, [#allocation2], [#allocation4]
    $region5: #{my_model_forward.1} parent=1 // pred_fallthru
      _
    // Predicated region
    $region6: #{my_model_forward.1} parent=1 // pred_check
      _
    $region7: #{my_model_forward.1} parent=1 // pred_check_branch
      %32 = sbr.rel (0) target = $region9
    $region8: #{my_model_forward.1} parent=1 // pred_region
      _
    $region9: #{my_model_forward.1} parent=1 // pred_fallthru
      _
    // Predicated region
    $region10: #{my_model_forward.1} parent=1 // pred_check
      _
    $region11: #{my_model_forward.1} parent=1 // pred_check_branch
      %34 = sbr.rel (0) target = $region13
    $region12: #{my_model_forward.1} parent=1 // pred_region
      _
    $region13: #{my_model_forward.1} parent=1 // pred_fallthru
      _
    // Predicated region
    $region14: #{my_model_forward.1} parent=1 // pred_check
      _
    $region15: #{my_model_forward.1} parent=1 // pred_check_branch
      %36 = sbr.rel (0) target = $region17
    $region16: #{my_model_forward.1} parent=1 // pred_region
      _
    $region17: #{my_model_forward.1} parent=1 // pred_fallthru
      _
    // Predicated region
    $region18: #{my_model_forward.1} parent=1 // pred_check
      _
    $region19: #{my_model_forward.1} parent=1 // pred_check_branch
      %38 = sbr.rel (0) target = $region21
    $region20: #{my_model_forward.1} parent=1 // pred_region
      _
    $region21: #{my_model_forward.1} parent=1 // pred_fallthru
      _
    // Predicated region
    $region22: #{my_model_forward.1} parent=1 // pred_check
      _
    $region23: #{my_model_forward.1} parent=1 // pred_check_branch
      %40 = sbr.rel (0) target = $region25
    $region24: #{my_model_forward.1} parent=1 // pred_region
      _
    $region25: #{my_model_forward.1} parent=1 // pred_fallthru
      _
    // Predicated region
    $region26: #{my_model_forward.1} parent=1 // pred_check
      _
    $region27: #{my_model_forward.1} parent=1 // pred_check_branch
      %42 = sbr.rel (0) target = $region29
    $region28: #{my_model_forward.1} parent=1 // pred_region
      %s44 = ssub.s32 2048, 2048
      %45 = vsyncadd [#allocation3], %s44
      %s46 = sshll.u32 [#allocation5], 4
      %s47 = int_to_ptr.vmem [resolvable:$true] %s46
      %52 = dma.hbm_to_vmem [thread:$0]  %s6, 2048, %s47, [#allocation3], 64, 64, 4
    $region29: #{my_model_forward.1} parent=1 // pred_fallthru
      _
    // Predicated region
    $region30: #{my_model_forward.1} parent=1 // pred_check
      _
    $region31: #{my_model_forward.1} parent=1 // pred_check_branch
      %54 = sbr.rel (0) target = $region33
    $region32: #{my_model_forward.1} parent=1 // pred_region
      %s56 = ssub.s32 16, 16
      %57 = vsyncadd [#allocation7], %s56
      %s59 = sshll.u32 [#allocation6], 4
      %s60 = int_to_ptr.vmem [resolvable:$true] %s59
      %62 = dma.hbm_to_vmem [thread:$0]  %s7, 16, %s60, [#allocation7]
    $region33: #{my_model_forward.1} parent=1 // pred_fallthru
      _
    // Predicated region
    $region34: #{my_model_forward.1} parent=1 // pred_check
      _
    $region35: #{my_model_forward.1} parent=1 // pred_check_branch
      %64 = sbr.rel (0) target = $region37
    $region36: #{my_model_forward.1} parent=1 // pred_region
      _
    $region37: #{my_model_forward.1} parent=1 // pred_fallthru
      _
    // Predicated region
    $region38: #{my_model_forward.1} parent=1 // pred_check
      _
    $region39: #{my_model_forward.1} parent=1 // pred_check_branch
      %66 = sbr.rel (0) target = $region41
    $region40: #{my_model_forward.1} parent=1 // pred_region
      %s68 = ssub.s32 16, 16
      %69 = vsyncadd [#allocation7], %s68
      %s71 = sshll.u32 [#allocation8], 4
      %s72 = int_to_ptr.vmem [resolvable:$true] %s71
      %74 = dma.hbm_to_vmem [thread:$0]  %s9, 16, %s72, [#allocation7]
    $region41: #{my_model_forward.1} parent=1 // pred_fallthru
      _
    // Predicated region
    $region42: #{my_model_forward.1} parent=1 // pred_check
      _
    $region43: #{my_model_forward.1} parent=1 // pred_check_branch
      %76 = sbr.rel (0) target = $region45
    $region44: #{my_model_forward.1} parent=1 // pred_region
      %s78 = ssub.s32 1024, 1024
      %79 = vsyncadd [#allocation10], %s78
      %s80 = sshll.u32 [#allocation9], 4
      %s81 = int_to_ptr.vmem [resolvable:$true] %s80
      %86 = dma.hbm_to_vmem [thread:$0]  %s10, 1024, %s81, [#allocation10], 64, 64, 4
    $region45: #{my_model_forward.1} parent=1 // pred_fallthru
      _
    // Predicated region
    $region46: #{my_model_forward.1} parent=1 // pred_check
      _
    $region47: #{my_model_forward.1} parent=1 // pred_check_branch
      %88 = sbr.rel (0) target = $region49
    $region48: #{my_model_forward.1} parent=1 // pred_region
      %s90 = ssub.s32 16, 16
      %91 = vsyncadd [#allocation10], %s90
      %s93 = sshll.u32 [#allocation11], 4
      %s94 = int_to_ptr.vmem [resolvable:$true] %s93
      %96 = dma.hbm_to_vmem [thread:$0]  %s11, 16, %s94, [#allocation10]
    $region49: #{my_model_forward.1} parent=1 // pred_fallthru
      _
    // Predicated region
    $region50: #{my_model_forward.1} parent=1 // pred_check
      _
    $region51: #{my_model_forward.1} parent=1 // pred_check_branch
      %98 = sbr.rel (0) target = $region53
    $region52: #{my_model_forward.1} parent=1 // pred_region
      %99 = dma.done [#allocation4], 16
    $region53: #{my_model_forward.1} parent=1 // pred_fallthru
      _
    // Predicated region
    $region54: #{my_model_forward.1} parent=1 // pred_check
      _
    $region55: #{my_model_forward.1} parent=1 // pred_check_branch
      %101 = sbr.rel (0) target = $region57
    $region56: #{my_model_forward.1} parent=1 // pred_region
      %102 = dma.done [#allocation3], 2048
    $region57: #{my_model_forward.1} parent=1 // pred_fallthru
      _
    // Predicated region
    $region58: #{my_model_forward.1} parent=1 // pred_check
      _
    $region59: #{my_model_forward.1} parent=1 // pred_check_branch
      %104 = sbr.rel (0) target = $region61
    $region60: #{my_model_forward.1} parent=1 // pred_region
      %105 = dma.done [#allocation7], 16
    $region61: #{my_model_forward.1} parent=1 // pred_fallthru
      _
    // Predicated region
    $region62: #{my_model_forward.1} parent=1 // pred_check
      _
    $region63: #{my_model_forward.1} parent=1 // pred_check_branch
      %107 = sbr.rel (0) target = $region65
    $region64: #{my_model_forward.1} parent=1 // pred_region
      %108 = dma.done [#allocation7], 16
    $region65: #{my_model_forward.1} parent=1 // pred_fallthru
      _
    // Predicated region
    $region66: #{my_model_forward.1} parent=1 // pred_check
      _
    $region67: #{my_model_forward.1} parent=1 // pred_check_branch
      %110 = sbr.rel (0) target = $region69
    $region68: #{my_model_forward.1} parent=1 // pred_region
      %111 = dma.done [#allocation10], 1024
    $region69: #{my_model_forward.1} parent=1 // pred_fallthru
      _
    // Predicated region
    $region70: #{my_model_forward.1} parent=1 // pred_check
      _
    $region71: #{my_model_forward.1} parent=1 // pred_check_branch
      %113 = sbr.rel (0) target = $region73
    $region72: #{my_model_forward.1} parent=1 // pred_region
      %114 = dma.done [#allocation10], 16
    $region73: #{my_model_forward.1} parent=1 // pred_fallthru
      _
    %115 = sfence
    %s117 = sld [smem:[#allocation2]]
    %s118 = sld [smem:[#allocation2 + $0x1]]
    %v119 = vld [vmem:[%s1] sm:$0xf]
    %v120 = vld [vmem:[%s2] sm:$0xff]
    %v121 = vld [vmem:[%s3] sm:$0xff]
    %v122 = vld [vmem:[%s4] sm:$0xff]
    %v123 = vld [vmem:[%s4 + $0x8] sm:$0xff]
    %v124 = vld [vmem:[%s4 + $0x10] sm:$0xff]
    %v125 = vld [vmem:[%s4 + $0x18] sm:$0xff]
    %v126 = vld [vmem:[%s4 + $0x20] sm:$0xff]
    %v127 = vld [vmem:[%s4 + $0x28] sm:$0xff]
    %v128 = vld [vmem:[%s5] sm:$0x3]
    %v130 = vlaneseq
    %v131 = vshrl.u32 %v130, 7
    %v132 = vsub.s32 0, %v131
    %v133 = vrot.slane %v128, %v132
    %v134 = vlaneseq
    %v135 = vshrl.u32 %v134, 7
    %v136 = vsub.s32 1, %v135
    %v137 = vrot.slane %v128, %v136
    %v146 = vunpack.c.l.b16 %v122
    %v147 = vunpack.c.h.b16 %v122
    %v148 = vunpack.c.l.b16 %v123
    %v149 = vunpack.c.h.b16 %v123
    %v150 = vunpack.c.l.b16 %v124
    %v151 = vunpack.c.h.b16 %v124
    %v152 = vunpack.c.l.b16 %v125
    %v153 = vunpack.c.h.b16 %v125
    %v154 = vunpack.c.l.b16 %v126
    %v155 = vunpack.c.h.b16 %v126
    %v156 = vunpack.c.l.b16 %v127
    %v157 = vunpack.c.h.b16 %v127
    %v158 = vpack.c.b16 %v148, %v146
    %v159 = vpack.c.b16 %v149, %v147
    %v160 = vpack.c.b16 %v152, %v150
    %v161 = vpack.c.b16 %v153, %v151
    %v162 = vpack.c.b16 %v156, %v154
    %v163 = vpack.c.b16 %v157, %v155
    %vm170 = vcmask 392192
    %v172 = vsel %vm170, %v119, 0
    %174 = vmatprep.subr.bf16.mxu0 %v159
    %175 = vmatpush1.bf16.msra.mxu0 %v158
    %176 = vmatprep.subr.bf16.mxu0 %v161
    %177 = vmatpush1.bf16.msra.mxu0 %v160
    %178 = vmatprep.subr.bf16.mxu0 %v163
    %179 = vmatpush1.bf16.msra.mxu0 %v162
    %180 = vmatprep.subr.bf16.mxu0 0
    %181 = vmatpush1.bf16.msra.mxu0 0
    %182 = vmatprep.subr.bf16.mxu0 0
    %183 = vmatpush1.bf16.msra.mxu0 0
    %184 = vmatprep.subr.bf16.mxu0 0
    %185 = vmatpush1.bf16.msra.mxu0 0
    %186 = vmatprep.subr.bf16.mxu0 0
    %187 = vmatpush1.bf16.msra.mxu0 0
    %188 = vmatprep.subr.bf16.mxu0 0
    %189 = vmatpush1.bf16.msra.mxu0 0
    %190 = vmatprep.subr.bf16.mxu0 0
    %191 = vmatpush1.bf16.msra.mxu0 0
    %192 = vmatprep.subr.bf16.mxu0 0
    %193 = vmatpush1.bf16.msra.mxu0 0
    %194 = vmatprep.subr.bf16.mxu0 0
    %195 = vmatpush1.bf16.msra.mxu0 0
    %196 = vmatprep.subr.bf16.mxu0 0
    %197 = vmatpush1.bf16.msra.mxu0 0
    %198 = vmatprep.subr.bf16.mxu0 0
    %199 = vmatpush1.bf16.msra.mxu0 0
    %200 = vmatprep.subr.bf16.mxu0 0
    %201 = vmatpush1.bf16.msra.mxu0 0
    %202 = vmatprep.subr.bf16.mxu0 0
    %203 = vmatpush1.bf16.msra.mxu0 0
    %204 = vmatprep.subr.bf16.mxu0 0
    %205 = vmatpush1.bf16.msra.mxu0 0
    %206 = vmatprep.mubr.bf16.mxu0 0
    %207 = vmatmul.mubr.bf16.gmra.mrb[0].mxu0 %v172
    %v208 = vpop.f32.mrb[0].mxu0
    %v209 = vadd.f32 %v133, %v208
    %v210 = vpop.f32.mrb[0].mxu0
    %v211 = vadd.f32 %v137, %v210
    %v212 = vpop.f32.mrb[0].mxu0
    %v213 = vpop.f32.mrb[0].mxu0
    %214 = vdwg.mxu0
    %v215 = vmax.f32 %v209, 0.0
    %v216 = vmax.f32 %v211, 0.0
    %v217 = vpack.c.bf16 %v215, %v215
    %v218 = vpack.c.bf16 %v216, %v216
    %v219 = vld [vmem:[#allocation5] sm:$0xf]
    %v220 = vld [vmem:[#allocation5 + $0x4] sm:$0xf]
    %v221 = vld [vmem:[#allocation5 + $0x8] sm:$0xf]
    %v222 = vld [vmem:[#allocation5 + $0xc] sm:$0xf]
    %v223 = vld [vmem:[#allocation5 + $0x10] sm:$0xf]
    %v224 = vld [vmem:[#allocation5 + $0x14] sm:$0xf]
    %v225 = vld [vmem:[#allocation5 + $0x18] sm:$0xf]
    %v226 = vld [vmem:[#allocation5 + $0x1c] sm:$0xf]
    %v227 = vld [vmem:[#allocation5 + $0x20] sm:$0xf]
    %v228 = vld [vmem:[#allocation5 + $0x24] sm:$0xf]
    %v229 = vld [vmem:[#allocation5 + $0x28] sm:$0xf]
    %v230 = vld [vmem:[#allocation5 + $0x2c] sm:$0xf]
    %v231 = vld [vmem:[#allocation5 + $0x30] sm:$0xf]
    %v232 = vld [vmem:[#allocation5 + $0x34] sm:$0xf]
    %v233 = vld [vmem:[#allocation5 + $0x38] sm:$0xf]
    %v234 = vld [vmem:[#allocation5 + $0x3c] sm:$0xf]
    %v235 = vld [vmem:[#allocation5 + $0x40] sm:$0xf]
    %v236 = vld [vmem:[#allocation5 + $0x44] sm:$0xf]
    %v237 = vld [vmem:[#allocation5 + $0x48] sm:$0xf]
    %v238 = vld [vmem:[#allocation5 + $0x4c] sm:$0xf]
    %v239 = vld [vmem:[#allocation5 + $0x50] sm:$0xf]
    %v240 = vld [vmem:[#allocation5 + $0x54] sm:$0xf]
    %v241 = vld [vmem:[#allocation5 + $0x58] sm:$0xf]
    %v242 = vld [vmem:[#allocation5 + $0x5c] sm:$0xf]
    %v243 = vld [vmem:[#allocation5 + $0x60] sm:$0xf]
    %v244 = vld [vmem:[#allocation5 + $0x64] sm:$0xf]
    %v245 = vld [vmem:[#allocation5 + $0x68] sm:$0xf]
    %v246 = vld [vmem:[#allocation5 + $0x6c] sm:$0xf]
    %v247 = vld [vmem:[#allocation5 + $0x70] sm:$0xf]
    %v248 = vld [vmem:[#allocation5 + $0x74] sm:$0xf]
    %v249 = vld [vmem:[#allocation5 + $0x78] sm:$0xf]
    %v250 = vld [vmem:[#allocation5 + $0x7c] sm:$0xf]
    %v251 = vld [vmem:[#allocation6] sm:$0x1]
    %v253 = vlaneseq
    %v254 = vshrl.u32 %v253, 7
    %v255 = vsub.s32 0, %v254
    %v256 = vrot.slane %v251, %v255
    %v290 = vunpack.c.l.b16 %v219
    %v291 = vunpack.c.l.b16 %v220
    %v292 = vunpack.c.l.b16 %v221
    %v293 = vunpack.c.l.b16 %v222
    %v294 = vunpack.c.l.b16 %v223
    %v295 = vunpack.c.l.b16 %v224
    %v296 = vunpack.c.l.b16 %v225
    %v297 = vunpack.c.l.b16 %v226
    %v298 = vunpack.c.l.b16 %v227
    %v299 = vunpack.c.l.b16 %v228
    %v300 = vunpack.c.l.b16 %v229
    %v301 = vunpack.c.l.b16 %v230
    %v302 = vunpack.c.l.b16 %v231
    %v303 = vunpack.c.l.b16 %v232
    %v304 = vunpack.c.l.b16 %v233
    %v305 = vunpack.c.l.b16 %v234
    %v306 = vunpack.c.l.b16 %v235
    %v307 = vunpack.c.l.b16 %v236
    %v308 = vunpack.c.l.b16 %v237
    %v309 = vunpack.c.l.b16 %v238
    %v310 = vunpack.c.l.b16 %v239
    %v311 = vunpack.c.l.b16 %v240
    %v312 = vunpack.c.l.b16 %v241
    %v313 = vunpack.c.l.b16 %v242
    %v314 = vunpack.c.l.b16 %v243
    %v315 = vunpack.c.l.b16 %v244
    %v316 = vunpack.c.l.b16 %v245
    %v317 = vunpack.c.l.b16 %v246
    %v318 = vunpack.c.l.b16 %v247
    %v319 = vunpack.c.l.b16 %v248
    %v320 = vunpack.c.l.b16 %v249
    %v321 = vunpack.c.l.b16 %v250
    %v322 = vpack.c.b16 %v291, %v290
    %v323 = vpack.c.b16 %v293, %v292
    %v324 = vpack.c.b16 %v295, %v294
    %v325 = vpack.c.b16 %v297, %v296
    %v326 = vpack.c.b16 %v299, %v298
    %v327 = vpack.c.b16 %v301, %v300
    %v328 = vpack.c.b16 %v303, %v302
    %v329 = vpack.c.b16 %v305, %v304
    %v330 = vpack.c.b16 %v307, %v306
    %v331 = vpack.c.b16 %v309, %v308
    %v332 = vpack.c.b16 %v311, %v310
    %v333 = vpack.c.b16 %v313, %v312
    %v334 = vpack.c.b16 %v315, %v314
    %v335 = vpack.c.b16 %v317, %v316
    %v336 = vpack.c.b16 %v319, %v318
    %v337 = vpack.c.b16 %v321, %v320
    %354 = vmatprep.subr.bf16.mxu0 0
    %355 = vmatpush1.bf16.msra.mxu0 %v322
    %356 = vmatprep.subr.bf16.mxu0 0
    %357 = vmatpush1.bf16.msra.mxu0 %v323
    %358 = vmatprep.subr.bf16.mxu0 0
    %359 = vmatpush1.bf16.msra.mxu0 %v324
    %360 = vmatprep.subr.bf16.mxu0 0
    %361 = vmatpush1.bf16.msra.mxu0 %v325
    %362 = vmatprep.subr.bf16.mxu0 0
    %363 = vmatpush1.bf16.msra.mxu0 %v326
    %364 = vmatprep.subr.bf16.mxu0 0
    %365 = vmatpush1.bf16.msra.mxu0 %v327
    %366 = vmatprep.subr.bf16.mxu0 0
    %367 = vmatpush1.bf16.msra.mxu0 %v328
    %368 = vmatprep.subr.bf16.mxu0 0
    %369 = vmatpush1.bf16.msra.mxu0 %v329
    %370 = vmatprep.subr.bf16.mxu0 0
    %371 = vmatpush1.bf16.msra.mxu0 %v330
    %372 = vmatprep.subr.bf16.mxu0 0
    %373 = vmatpush1.bf16.msra.mxu0 %v331
    %374 = vmatprep.subr.bf16.mxu0 0
    %375 = vmatpush1.bf16.msra.mxu0 %v332
    %376 = vmatprep.subr.bf16.mxu0 0
    %377 = vmatpush1.bf16.msra.mxu0 %v333
    %378 = vmatprep.subr.bf16.mxu0 0
    %379 = vmatpush1.bf16.msra.mxu0 %v334
    %380 = vmatprep.subr.bf16.mxu0 0
    %381 = vmatpush1.bf16.msra.mxu0 %v335
    %382 = vmatprep.subr.bf16.mxu0 0
    %383 = vmatpush1.bf16.msra.mxu0 %v336
    %384 = vmatprep.subr.bf16.mxu0 0
    %385 = vmatpush1.bf16.msra.mxu0 %v337
    %386 = vmatprep.mubr.bf16.mxu0 %v218
    %387 = vmatmul.mubr.bf16.gmra.mrb[0].mxu0 %v217
    %v388 = vpop.f32.mrb[0].mxu0
    %v389 = vadd.f32 %v256, %v388
    %v390 = vpop.f32.mrb[0].mxu0
    %v391 = vpop.f32.mrb[0].mxu0
    %v392 = vpop.f32.mrb[0].mxu0
    %393 = vdwg.mxu0
    %v394 = vmax.f32 %v389, 0.0
    %v395 = vpack.c.bf16 %v394, %v394
    %v396 = vld [vmem:[%s8] sm:$0xf]
    %v397 = vld [vmem:[%s8 + $0x4] sm:$0xf]
    %v398 = vld [vmem:[%s8 + $0x8] sm:$0xf]
    %v399 = vld [vmem:[%s8 + $0xc] sm:$0xf]
    %v400 = vld [vmem:[%s8 + $0x10] sm:$0xf]
    %v401 = vld [vmem:[%s8 + $0x14] sm:$0xf]
    %v402 = vld [vmem:[%s8 + $0x18] sm:$0xf]
    %v403 = vld [vmem:[%s8 + $0x1c] sm:$0xf]
    %v404 = vld [vmem:[%s8 + $0x20] sm:$0xf]
    %v405 = vld [vmem:[%s8 + $0x24] sm:$0xf]
    %v406 = vld [vmem:[%s8 + $0x28] sm:$0xf]
    %v407 = vld [vmem:[%s8 + $0x2c] sm:$0xf]
    %v408 = vld [vmem:[%s8 + $0x30] sm:$0xf]
    %v409 = vld [vmem:[%s8 + $0x34] sm:$0xf]
    %v410 = vld [vmem:[%s8 + $0x38] sm:$0xf]
    %v411 = vld [vmem:[%s8 + $0x3c] sm:$0xf]
    %v412 = vld [vmem:[#allocation8] sm:$0x1]
    %v414 = vlaneseq
    %v415 = vshrl.u32 %v414, 7
    %v416 = vsub.s32 0, %v415
    %v417 = vrot.slane %v412, %v416
    %v435 = vunpack.c.l.b16 %v396
    %v436 = vunpack.c.l.b16 %v397
    %v437 = vunpack.c.l.b16 %v398
    %v438 = vunpack.c.l.b16 %v399
    %v439 = vunpack.c.l.b16 %v400
    %v440 = vunpack.c.l.b16 %v401
    %v441 = vunpack.c.l.b16 %v402
    %v442 = vunpack.c.l.b16 %v403
    %v443 = vunpack.c.l.b16 %v404
    %v444 = vunpack.c.l.b16 %v405
    %v445 = vunpack.c.l.b16 %v406
    %v446 = vunpack.c.l.b16 %v407
    %v447 = vunpack.c.l.b16 %v408
    %v448 = vunpack.c.l.b16 %v409
    %v449 = vunpack.c.l.b16 %v410
    %v450 = vunpack.c.l.b16 %v411
    %v451 = vpack.c.b16 %v436, %v435
    %v452 = vpack.c.b16 %v438, %v437
    %v453 = vpack.c.b16 %v440, %v439
    %v454 = vpack.c.b16 %v442, %v441
    %v455 = vpack.c.b16 %v444, %v443
    %v456 = vpack.c.b16 %v446, %v445
    %v457 = vpack.c.b16 %v448, %v447
    %v458 = vpack.c.b16 %v450, %v449
    %467 = vmatprep.subr.bf16.mxu0 0
    %468 = vmatpush1.bf16.msra.mxu0 %v451
    %469 = vmatprep.subr.bf16.mxu0 0
    %470 = vmatpush1.bf16.msra.mxu0 %v452
    %471 = vmatprep.subr.bf16.mxu0 0
    %472 = vmatpush1.bf16.msra.mxu0 %v453
    %473 = vmatprep.subr.bf16.mxu0 0
    %474 = vmatpush1.bf16.msra.mxu0 %v454
    %475 = vmatprep.subr.bf16.mxu0 0
    %476 = vmatpush1.bf16.msra.mxu0 %v455
    %477 = vmatprep.subr.bf16.mxu0 0
    %478 = vmatpush1.bf16.msra.mxu0 %v456
    %479 = vmatprep.subr.bf16.mxu0 0
    %480 = vmatpush1.bf16.msra.mxu0 %v457
    %481 = vmatprep.subr.bf16.mxu0 0
    %482 = vmatpush1.bf16.msra.mxu0 %v458
    %483 = vmatprep.subr.bf16.mxu0 0
    %484 = vmatpush1.bf16.msra.mxu0 0
    %485 = vmatprep.subr.bf16.mxu0 0
    %486 = vmatpush1.bf16.msra.mxu0 0
    %487 = vmatprep.subr.bf16.mxu0 0
    %488 = vmatpush1.bf16.msra.mxu0 0
    %489 = vmatprep.subr.bf16.mxu0 0
    %490 = vmatpush1.bf16.msra.mxu0 0
    %491 = vmatprep.subr.bf16.mxu0 0
    %492 = vmatpush1.bf16.msra.mxu0 0
    %493 = vmatprep.subr.bf16.mxu0 0
    %494 = vmatpush1.bf16.msra.mxu0 0
    %495 = vmatprep.subr.bf16.mxu0 0
    %496 = vmatpush1.bf16.msra.mxu0 0
    %497 = vmatprep.subr.bf16.mxu0 0
    %498 = vmatpush1.bf16.msra.mxu0 0
    %499 = vmatprep.mubr.bf16.mxu0 0
    %500 = vmatmul.mubr.bf16.gmra.mrb[0].mxu0 %v395
    %v501 = vpop.f32.mrb[0].mxu0
    %v502 = vadd.f32 %v417, %v501
    %v503 = vpop.f32.mrb[0].mxu0
    %v504 = vpop.f32.mrb[0].mxu0
    %v505 = vpop.f32.mrb[0].mxu0
    %506 = vdwg.mxu0
    %v507 = vmax.f32 %v502, 0.0
    %v508 = vpack.c.bf16 %v507, %v507
    %v509 = vld [vmem:[#allocation9] sm:$0xf]
    %v510 = vld [vmem:[#allocation9 + $0x4] sm:$0xf]
    %v511 = vld [vmem:[#allocation9 + $0x8] sm:$0xf]
    %v512 = vld [vmem:[#allocation9 + $0xc] sm:$0xf]
    %v513 = vld [vmem:[#allocation9 + $0x10] sm:$0xf]
    %v514 = vld [vmem:[#allocation9 + $0x14] sm:$0xf]
    %v515 = vld [vmem:[#allocation9 + $0x18] sm:$0xf]
    %v516 = vld [vmem:[#allocation9 + $0x1c] sm:$0xf]
    %v517 = vld [vmem:[#allocation9 + $0x20] sm:$0xf]
    %v518 = vld [vmem:[#allocation9 + $0x24] sm:$0xf]
    %v519 = vld [vmem:[#allocation9 + $0x28] sm:$0xf]
    %v520 = vld [vmem:[#allocation9 + $0x2c] sm:$0xf]
    %v521 = vld [vmem:[#allocation9 + $0x30] sm:$0xf]
    %v522 = vld [vmem:[#allocation9 + $0x34] sm:$0xf]
    %v523 = vld [vmem:[#allocation9 + $0x38] sm:$0xf]
    %v524 = vld [vmem:[#allocation9 + $0x3c] sm:$0xf]
    %v525 = vld [vmem:[#allocation11] sm:$0x1]
    %v527 = vlaneseq
    %v528 = vshrl.u32 %v527, 7
    %v529 = vsub.s32 0, %v528
    %v530 = vrot.slane %v525, %v529
    %v548 = vunpack.c.l.b16 %v509
    %v549 = vunpack.c.l.b16 %v510
    %v550 = vunpack.c.l.b16 %v511
    %v551 = vunpack.c.l.b16 %v512
    %v552 = vunpack.c.l.b16 %v513
    %v553 = vunpack.c.l.b16 %v514
    %v554 = vunpack.c.l.b16 %v515
    %v555 = vunpack.c.l.b16 %v516
    %v556 = vunpack.c.l.b16 %v517
    %v557 = vunpack.c.l.b16 %v518
    %v558 = vunpack.c.l.b16 %v519
    %v559 = vunpack.c.l.b16 %v520
    %v560 = vunpack.c.l.b16 %v521
    %v561 = vunpack.c.l.b16 %v522
    %v562 = vunpack.c.l.b16 %v523
    %v563 = vunpack.c.l.b16 %v524
    %v564 = vpack.c.b16 %v549, %v548
    %v565 = vpack.c.b16 %v551, %v550
    %v566 = vpack.c.b16 %v553, %v552
    %v567 = vpack.c.b16 %v555, %v554
    %v568 = vpack.c.b16 %v557, %v556
    %v569 = vpack.c.b16 %v559, %v558
    %v570 = vpack.c.b16 %v561, %v560
    %v571 = vpack.c.b16 %v563, %v562
    %580 = vmatprep.subr.bf16.mxu0 0
    %581 = vmatpush1.bf16.msra.mxu0 %v564
    %582 = vmatprep.subr.bf16.mxu0 0
    %583 = vmatpush1.bf16.msra.mxu0 %v565
    %584 = vmatprep.subr.bf16.mxu0 0
    %585 = vmatpush1.bf16.msra.mxu0 %v566
    %586 = vmatprep.subr.bf16.mxu0 0
    %587 = vmatpush1.bf16.msra.mxu0 %v567
    %588 = vmatprep.subr.bf16.mxu0 0
    %589 = vmatpush1.bf16.msra.mxu0 %v568
    %590 = vmatprep.subr.bf16.mxu0 0
    %591 = vmatpush1.bf16.msra.mxu0 %v569
    %592 = vmatprep.subr.bf16.mxu0 0
    %593 = vmatpush1.bf16.msra.mxu0 %v570
    %594 = vmatprep.subr.bf16.mxu0 0
    %595 = vmatpush1.bf16.msra.mxu0 %v571
    %596 = vmatprep.subr.bf16.mxu0 0
    %597 = vmatpush1.bf16.msra.mxu0 0
    %598 = vmatprep.subr.bf16.mxu0 0
    %599 = vmatpush1.bf16.msra.mxu0 0
    %600 = vmatprep.subr.bf16.mxu0 0
    %601 = vmatpush1.bf16.msra.mxu0 0
    %602 = vmatprep.subr.bf16.mxu0 0
    %603 = vmatpush1.bf16.msra.mxu0 0
    %604 = vmatprep.subr.bf16.mxu0 0
    %605 = vmatpush1.bf16.msra.mxu0 0
    %606 = vmatprep.subr.bf16.mxu0 0
    %607 = vmatpush1.bf16.msra.mxu0 0
    %608 = vmatprep.subr.bf16.mxu0 0
    %609 = vmatpush1.bf16.msra.mxu0 0
    %610 = vmatprep.subr.bf16.mxu0 0
    %611 = vmatpush1.bf16.msra.mxu0 0
    %612 = vmatprep.mubr.bf16.mxu0 0
    %613 = vmatmul.mubr.bf16.gmra.mrb[0].mxu0 %v508
    %v614 = vpop.f32.mrb[0].mxu0
    %v615 = vadd.f32 %v530, %v614
    %v616 = vpop.f32.mrb[0].mxu0
    %v617 = vpop.f32.mrb[0].mxu0
    %v618 = vpop.f32.mrb[0].mxu0
    %619 = vdwg.mxu0
    %v620 = vrot.slane %v121, 1
    %v621 = vlaneseq
    %v622 = vshrl.u32 %v621, 7
    %vm623 = vcmp.lt.s32.totalorder %v622, 7
    %v624 = vsub.f32 %v615, %v620
    %v625 = vsel %vm623, %v624, 0.0
    %v626 = vmul.f32 %v625, %v625
    %627 = vadd.xlane.f32.xlu0 %v626
    %v628 = vpop.xlane.xlu0 %627
    %v629 = vrot.slane %v628, 4
    %v630 = vadd.f32 %v628, %v629
    %v631 = vrot.slane %v630, 2
    %v632 = vadd.f32 %v630, %v631
    %v633 = vrot.slane %v632, 1
    %v634 = vadd.f32 %v632, %v633
    %s635 = vtos %v634
    %v636 = vstv %s635
    %v637 = vrsqrt.pop %v636
    %v638 = vmul.f32 %v636, %v637
    %vm639 = vcmp.eq.f32.partialorder %v636, inf
    %v640 = vsel %vm639, %v636, %v638
    %vm641 = vcmp.eq.f32.partialorder %v636, 0.0
    %v642 = vand.u32 %v636, 2147483648
    %v643 = vsel %vm641, %v642, %v640
    %v644 = vmul.f32 %v643, 0.14285715
    %vm645 = vcmask 261120
    %v646 = vsel %vm645, %v120, 0.0
    %v647 = vrot.slane %v646, 4
    %v648 = vadd.f32 %v646, %v647
    %v649 = vrot.slane %v648, 2
    %v650 = vadd.f32 %v648, %v649
    %v651 = vrot.slane %v650, 1
    %v652 = vadd.f32 %v650, %v651
    %v653 = vrcp.pop 8.0
    %v654 = vmul.f32 %v652, %v653
    %v655 = vrcp.pop 32.0
    %s656 = vtos %v655
    %s657 = smul.f32 %s117, %s656
    %v658 = vand.u32 2147483647, %v654
    %v659 = vsel %vm645, %v658, 0.0
    %660 = vadd.xlane.f32.xlu0 %v659
    %v661 = vpop.xlane.xlu0 %660
    %v662 = vstv %s657
    %v663 = vmul.f32 %v662, %v661
    %v664 = vmul.f32 %v120, %v120
    %v665 = vsel %vm645, %v664, 0.0
    %666 = vadd.xlane.f32.xlu0 %v665
    %v667 = vpop.xlane.xlu0 %666
    %v668 = vrot.slane %v667, 4
    %v669 = vadd.f32 %v667, %v668
    %v670 = vrot.slane %v669, 2
    %v671 = vadd.f32 %v669, %v670
    %v672 = vrot.slane %v671, 1
    %v673 = vadd.f32 %v671, %v672
    %v674 = vmul.f32 %v673, %v653
    %v675 = vrcp.pop 32.0
    %v676 = vmul.f32 %v674, %v675
    %v677 = vsub.f32 %v676, 1.0
    %v678 = vand.u32 2147483647, %v677
    %v679 = vstv %s117
    %v680 = vmul.f32 %v679, %v678
    %v681 = vrot.slane %v120, 1
    %v682 = vsub.f32 %v681, %v120
    %v683 = vsel %vm623, %v682, 0.0
    %v684 = vrcp.pop 224.0
    %s685 = vtos %v684
    %s686 = smul.f32 %s118, %s685
    %v687 = vand.u32 2147483647, %v683
    %v688 = vsel %vm645, %v687, 0.0
    %689 = vadd.xlane.f32.xlu0 %v688
    %v690 = vpop.xlane.xlu0 %689
    %v691 = vrot.slane %v690, 4
    %v692 = vadd.f32 %v690, %v691
    %v693 = vrot.slane %v692, 2
    %v694 = vadd.f32 %v692, %v693
    %v695 = vrot.slane %v694, 1
    %v696 = vadd.f32 %v694, %v695
    %s697 = vtos %v696
    %v698 = vstv %s697
    %v699 = vstv %s686
    %v700 = vmul.f32 %v699, %v698
    %v701 = vlaneseq
    %v702 = vand.u32 %v701, 127
    %vm703 = vcmp.eq.s32.totalorder %v702, 16
    %v704 = vsel %vm703, %v644, 0.0
    %vm705 = vcmp.eq.s32.totalorder %v702, 17
    %v706 = vsel %vm705, %v663, 0.0
    %v707 = vadd.f32 %v704, %v706
    %vm708 = vcmp.eq.s32.totalorder %v702, 18
    %v709 = vsel %vm708, %v680, 0.0
    %v710 = vadd.f32 %v707, %v709
    %vm711 = vcmp.eq.s32.totalorder %v702, 19
    %v712 = vsel %vm711, %v700, 0.0
    %v713 = vadd.f32 %v710, %v712
    %vm714 = vcmp.eq.s32.totalorder %v622, 7
    %v715 = vsel %vm714, %v713, 0.0
    %v716 = vadd.f32 %v615, %v715
    %717 = vst [vmem:[%s12] sm:$0xff] %v716
    // Predicated region
    $region74: #{my_model_forward.1} parent=1 // pred_check
      _
    $region75: #{my_model_forward.1} parent=1 // pred_check_branch
      %719 = sbr.rel (0) target = $region77
    $region76: #{my_model_forward.1} parent=1 // pred_region
      _
    $region77: #{my_model_forward.1} parent=1 // pred_fallthru
      _
    // Predicated region
    $region78: #{my_model_forward.1} parent=1 // pred_check
      _
    $region79: #{my_model_forward.1} parent=1 // pred_check_branch
      %721 = sbr.rel (0) target = $region81
    $region80: #{my_model_forward.1} parent=1 // pred_region
      _
    $region81: #{my_model_forward.1} parent=1 // pred_fallthru
      _
    %722 = vsyncpa [#allocation3], 1
    %723 = vsyncpa [#allocation7], 1
    %724 = vsyncpa [#allocation10], 1
    %725 = vsyncpa [#allocation4], 1

</llo_original>
